<compile_context>
chip_gen: v6e
topology: v6e:2x2x1
jax: 0.10.0
libtpu: 0.0.40
codegen_flags: <defaults>
</compile_context>

<pallas_src>
import jax
import jax.numpy as jnp
from jax.experimental import pallas as pl
from jax.experimental.pallas import tpu as pltpu

# Independent DMA streams issued per call. Multiple in-flight DMAs help saturate HBM
# bandwidth (notably v7x's 3.2 TB/s); harmless on v5e/v6e.
_DMA_CHUNKS = 4

# Below this size the fixed custom-call launch (~2-5 us) plus 2x-size HBM read+write
# dwarfs any benefit, so the wrapper just returns x (true identity, zero cost).
_BYPASS_BYTES = 4 * 1024 * 1024


def _identity_dma_kernel(x_hbm, o_hbm, sems):
    """Copy x -> o with a few direct HBM->HBM DMAs (no VMEM staging, no grid)."""
    rows = x_hbm.shape[0]
    n_chunks = min(_DMA_CHUNKS, rows)
    bounds = [(i * rows) // n_chunks for i in range(n_chunks + 1)]
    copies = []
    # Static Python loop: rows / bounds are trace-time constants.
    for i in range(n_chunks):
        lo, hi = bounds[i], bounds[i + 1]
        cp = pltpu.make_async_copy(
            x_hbm.at[pl.ds(lo, hi - lo)],
            o_hbm.at[pl.ds(lo, hi - lo)],
            sems.at[i],
        )
        cp.start()
        copies.append(cp)
    for cp in copies:
        cp.wait()


def _choose_flat_shape(size: int) -> tuple[int, int]:
    """Lossless 2-D view (rows, lanes) of a contiguous buffer.

    Prefer a wide 128-multiple last dim so the per-chunk DMAs are large and rows is
    big enough to split across several DMA streams. Non-128-divisible sizes fall back
    to a single fully-contiguous (1, size) row (a DMA does not care about lane width).
    """
    for lanes in (4096, 2048, 1024, 512, 256, 128):
        if size % lanes == 0:
            return size // lanes, lanes
    return 1, size


def _identity_copy(flat: jax.Array) -> jax.Array:
    rows, lanes = flat.shape
    return pl.pallas_call(
        _identity_dma_kernel,
        out_shape=jax.ShapeDtypeStruct((rows, lanes), flat.dtype),
        in_specs=[pl.BlockSpec(memory_space=pl.ANY)],
        out_specs=pl.BlockSpec(memory_space=pl.ANY),
        scratch_shapes=[pltpu.SemaphoreType.DMA((_DMA_CHUNKS,))],
    )(flat)


def dummy_model_forward(x: jax.Array, *, force_kernel: bool = False) -> jax.Array:
    """Pallas equivalent of DummyModel.forward: returns x unchanged (bit-exact).

    Small inputs (and scalars / empty tensors) bypass the kernel entirely; set
    force_kernel=True to always run the HBM->HBM DMA kernel (used by the tests).
    """
    if x.ndim == 0 or x.size == 0:
        return x
    nbytes = x.size * jnp.dtype(x.dtype).itemsize
    if not force_kernel and nbytes < _BYPASS_BYTES:
        # Identity needs zero HBM traffic -- returning x is strictly free.
        return x

    orig_shape = x.shape
    rows, lanes = _choose_flat_shape(x.size)
    flat = x.reshape(rows, lanes)
    out = _identity_copy(flat)
    return out.reshape(orig_shape)


if __name__ == "__main__":
    key = jax.random.PRNGKey(0)

    # Primary test: NCHW-style input (batch=2, C=4, H=16, W=16), float32.
    x = jax.random.normal(key, (2, 4, 16, 16), dtype=jnp.float32)

    # 1) Default path for a small input: pure bypass (exact identity, no kernel).
    y_bypass = jax.block_until_ready(dummy_model_forward(x))
    assert y_bypass.shape == x.shape and y_bypass.dtype == x.dtype
    assert bool(jnp.all(y_bypass == x)), "bypass path not bit-exact"

    # 2) Forced kernel path: exercises the HBM->HBM DMA Pallas kernel.
    y = jax.block_until_ready(dummy_model_forward(x, force_kernel=True))
    assert y.shape == x.shape, f"shape mismatch: {y.shape} vs {x.shape}"
    assert y.dtype == x.dtype, f"dtype mismatch: {y.dtype} vs {x.dtype}"
    assert bool(jnp.all(y == x)), "kernel values not bit-exact identical"

    # 3) Packed dtype (bf16) through the kernel.
    xb = jax.random.normal(jax.random.PRNGKey(0), (2, 4, 16, 16)).astype(jnp.bfloat16)
    yb = jax.block_until_ready(dummy_model_forward(xb, force_kernel=True))
    assert yb.shape == xb.shape and yb.dtype == xb.dtype and bool(jnp.all(yb == xb))

    # 4) Odd, non-128-divisible size -> (1, size) contiguous-DMA fallback.
    xo = jax.random.normal(jax.random.PRNGKey(0), (3, 5, 7), dtype=jnp.float32)
    yo = jax.block_until_ready(dummy_model_forward(xo, force_kernel=True))
    assert yo.shape == xo.shape and yo.dtype == xo.dtype and bool(jnp.all(yo == xo))

    print("KERNEL_OK")
</pallas_src>

<mosaic_0001>
module attributes {stable_mosaic.version = 11 : i64} {
  func.func @_identity_dma_kernel(%arg0: memref<1x2048xf32, #tpu.memory_space<any>>, %arg1: memref<1x2048xf32, #tpu.memory_space<any>>, %arg2: memref<4x!tpu.dma_semaphore, #tpu.memory_space<semaphore_mem>>) attributes {dimension_semantics = [], scalar_prefetch = 0 : i64, scratch_operands = 1 : i64, tpu.core_type = #tpu.core_type<tc>} {
    %c0_i32 = arith.constant 0 : i32
    %c0_i32_0 = arith.constant 0 : i32
    %c0_i32_1 = arith.constant 0 : i32
    %0 = tpu.memref_slice %arg0[%c0_i32_0, %c0_i32_1] : memref<1x2048xf32, #tpu.memory_space<any>> -> memref<1x2048xf32, #tpu.memory_space<any>>
    %c0_i32_2 = arith.constant 0 : i32
    %c0_i32_3 = arith.constant 0 : i32
    %1 = tpu.memref_slice %arg1[%c0_i32_2, %c0_i32_3] : memref<1x2048xf32, #tpu.memory_space<any>> -> memref<1x2048xf32, #tpu.memory_space<any>>
    %2 = tpu.memref_slice %arg2[%c0_i32] : memref<4x!tpu.dma_semaphore, #tpu.memory_space<semaphore_mem>> -> memref<1x!tpu.dma_semaphore, #tpu.memory_space<semaphore_mem>>
    %3 = tpu.memref_squeeze %2 : memref<1x!tpu.dma_semaphore, #tpu.memory_space<semaphore_mem>> -> memref<!tpu.dma_semaphore, #tpu.memory_space<semaphore_mem>>
    tpu.enqueue_dma source(%0 : memref<1x2048xf32, #tpu.memory_space<any>>) target(%1 : memref<1x2048xf32, #tpu.memory_space<any>>) target_semaphore(%3 : memref<!tpu.dma_semaphore, #tpu.memory_space<semaphore_mem>>)
    %c0_i32_4 = arith.constant 0 : i32
    %c0_i32_5 = arith.constant 0 : i32
    %c0_i32_6 = arith.constant 0 : i32
    %4 = tpu.memref_slice %arg0[%c0_i32_5, %c0_i32_6] : memref<1x2048xf32, #tpu.memory_space<any>> -> memref<1x2048xf32, #tpu.memory_space<any>>
    %c0_i32_7 = arith.constant 0 : i32
    %c0_i32_8 = arith.constant 0 : i32
    %5 = tpu.memref_slice %arg1[%c0_i32_7, %c0_i32_8] : memref<1x2048xf32, #tpu.memory_space<any>> -> memref<1x2048xf32, #tpu.memory_space<any>>
    %6 = tpu.memref_slice %arg2[%c0_i32_4] : memref<4x!tpu.dma_semaphore, #tpu.memory_space<semaphore_mem>> -> memref<1x!tpu.dma_semaphore, #tpu.memory_space<semaphore_mem>>
    %7 = tpu.memref_squeeze %6 : memref<1x!tpu.dma_semaphore, #tpu.memory_space<semaphore_mem>> -> memref<!tpu.dma_semaphore, #tpu.memory_space<semaphore_mem>>
    tpu.wait_dma2 semaphore(%7 : memref<!tpu.dma_semaphore, #tpu.memory_space<semaphore_mem>>) src(%4 : memref<1x2048xf32, #tpu.memory_space<any>>) dst(%5 : memref<1x2048xf32, #tpu.memory_space<any>>)
    return
  }
}

</mosaic_0001>

<llo_original>
// kernel: tpu_custom_call.1
$region0: #{tpu_custom_call.1}
  #allocation0 [shape = 'u32[]', space=smem, size = 0x4, offset = 0x4, fixed_abs, tag = 'smem constant byte address 0x4 - core index']
  #allocation1 [shape = 'u32[144,128]{1,0:T(1,128)}', space=vmem, size = 0x12000, scoped, tag = 'internal scratch']
  #allocation2 [shape = 's32[4]{0}', space=sflag, size = 0x10, scoped, tag = 'scratch operand']
  #allocation3 [shape = 's32[]', space=sflag, size = 0x4, offset = 0, fixed_abs, tag = 'sflag constant byte address 0x0 - dummy sync flag']
  #allocation4 [shape = 'u32[0]{0}', space=smem, size = 0, offset = 0, fixed_abs, tag = 'smem constant byte address 0x0 - null']
  %s0 = inlined_call_operand.hbm [shape: f32[1,2048], index: 0, kind: input, shape index: {}]
  %s1 = inlined_call_operand.hbm [shape: f32[1,2048], index: 1, kind: output, shape index: {}]
  %s2 = sld [smem:[#allocation0]]
  $region2: #{tpu_custom_call.1} parent=0
    _
  %s4 = ssub.s32 1, %s2
  %s5 = scalar_select 0, %s4, %s2
  %s7 = sshll.u32 1, 14
  %s8 = sxor.u32 4294967295, %s7
  %12 = dma.general %s0, 256, %s1, [#allocation2], 131072, [#allocation4], 0, 0
  %s13 = smul.u32 1, 16
  %s14 = sshll.u32 %s13, 4
  %15 = dma.done [#allocation2], %s14
  %16 = vsyncmov [#allocation2]
  %s17 = vpop.sfrf %16
  %p18 = scmp.eq.s32.totalorder %s17, 0
  %p19 = pneg %p18
  %21 = shalt.err (%p19)
  %s22 = scalar_lea.sflag [#allocation2], 1
  %23 = vsyncmov %s22
  %s24 = vpop.sfrf %23
  %p25 = scmp.eq.s32.totalorder %s24, 0
  %p26 = pneg %p25
  %28 = shalt.err (%p26)
  %s29 = scalar_lea.sflag [#allocation2], 2
  %30 = vsyncmov %s29
  %s31 = vpop.sfrf %30
  %p32 = scmp.eq.s32.totalorder %s31, 0
  %p33 = pneg %p32
  %35 = shalt.err (%p33)
  %s36 = scalar_lea.sflag [#allocation2], 3
  %37 = vsyncmov %s36
  %s38 = vpop.sfrf %37
  %p39 = scmp.eq.s32.totalorder %s38, 0
  %p40 = pneg %p39
  %42 = shalt.err (%p40)

</llo_original>
